<compile_context>
chip_gen: v6e
topology: v6e:2x2x1
jax: 0.10.0
libtpu: 0.0.40
codegen_flags: <defaults>
</compile_context>

<pallas_src>
import functools

import numpy as np
import jax
import jax.numpy as jnp
from jax.experimental import pallas as pl
from jax.experimental.pallas import tpu as pltpu

_BN_EPS = 1e-5
_PMAX = 4            # largest SAME pad needed (dil_conv_5x5: k=5, dilation=2 -> pad=4)
_NUM_PRIMS = 8       # DARTS primitive count (incl. trailing 'none')
_CORE_SPLIT = 2      # leading "parallel" grid axis (v7x dual TensorCore)
_NEG = float(np.finfo(np.float32).min)


# ----------------------------------------------------------------------------
# Kernel 1: StdConv preprocessing  (ReLU -> 1x1 conv -> BN(affine=False)), fused
# ----------------------------------------------------------------------------

def _stdconv_kernel(x_ref, w_ref, o_ref):
    x = jnp.maximum(x_ref[...], 0.0)                               # (M, Cin)
    y = jnp.dot(x, w_ref[...], preferred_element_type=jnp.float32)  # (M, Cout)
    # BatchNorm2d(affine=False), training mode (biased batch statistics).
    m = jnp.mean(y, axis=0, keepdims=True)
    d = y - m
    var = jnp.mean(d * d, axis=0, keepdims=True)
    o_ref[...] = d * jax.lax.rsqrt(var + _BN_EPS)


def std_conv(x_nhwc, w):
    """ops.StdConv on an (N, H, W, Cin) activation; returns (H, W, N*Cout)."""
    N, H, W, Cin = x_nhwc.shape
    Cout = w.shape[1]
    M = N * H * W
    out = pl.pallas_call(
        _stdconv_kernel,
        grid=(1,),
        in_specs=[pl.BlockSpec((M, Cin), lambda i: (0, 0)),
                  pl.BlockSpec((Cin, Cout), lambda i: (0, 0))],
        out_specs=pl.BlockSpec((M, Cout), lambda i: (0, 0)),
        out_shape=jax.ShapeDtypeStruct((M, Cout), jnp.float32),
    )(x_nhwc.reshape(M, Cin), w)
    # Lane-dense node layout: (H, W, N*Cout), n-major channel packing.
    return out.reshape(N, H, W, Cout).transpose(1, 2, 0, 3).reshape(H, W, N * Cout)


# ----------------------------------------------------------------------------
# Kernel 2: one DAG node = sum over incoming edges of MixedOp(state_j, w_j)
#           grid = (core_split, edges_per_core); per-core resident accumulator.
# ----------------------------------------------------------------------------

def _node_edges_kernel(mixw_ref, x_ref, pw_ref, dw3_ref, dw5_ref,
                       o_ref, pad_ref, *, H, W, N, C, E, EH):
    NC = N * C
    P = _PMAX
    c = pl.program_id(0)          # core-split index (partial accumulator id)
    e = pl.program_id(1)          # edge index within this core's slice
    edge = c * EH + e             # logical edge id (may overrun E-1 on the last core)

    @pl.when(e == 0)
    def _zero_scratch():
        # Persistent zero halo: interiors are rewritten per primitive; the halo
        # is only ever painted -inf for max-pool and immediately restored to 0.
        pad_ref[...] = jnp.zeros(pad_ref.shape, jnp.float32)

    @pl.when(edge < E)
    def _edge():
        x = x_ref[...]            # (H, W, N*C)
        pw = pw_ref[...]          # (6, NC, NC) block-diag 1x1 weights
        dw3 = dw3_ref[...]        # (3, 9, NC)  taps: sep3.dw1, sep3.dw2, dil3
        dw5 = dw5_ref[...]        # (3, 25, NC) taps: sep5.dw1, sep5.dw2, dil5
        inv_m = 1.0 / float(N * H * W)

        def mix_w(k):             # architecture weight, cheap SMEM scalar read
            return mixw_ref[edge * _NUM_PRIMS + k]

        def write_interior(v):    # place an (H, W, NC) activation at the _PMAX offset
            pad_ref[P:P + H, P:P + W, :] = v

        def ring(val):            # paint / restore the width-1 halo ring only
            row = jnp.full((1, W + 2, NC), val, jnp.float32)
            col = jnp.full((H, 1, NC), val, jnp.float32)
            pad_ref[P - 1:P, P - 1:P + W + 1, :] = row
            pad_ref[P + H:P + H + 1, P - 1:P + W + 1, :] = row
            pad_ref[P:P + H, P - 1:P, :] = col
            pad_ref[P:P + H, P + W:P + W + 1, :] = col

        def lane_group_mean(v):   # (1,1,NC) per-(n,c) sums -> per-c mean tiled to NC lanes
            g = v[:, :, 0:C]
            for n in range(1, N):
                g = g + v[:, :, n * C:(n + 1) * C]
            g = g * inv_m
            return jnp.concatenate([g] * N, axis=-1)

        def bn(y):                # BatchNorm2d(affine=False), training-mode batch stats
            s = jnp.sum(jnp.sum(y, axis=1, keepdims=True), axis=0, keepdims=True)
            m = lane_group_mean(s)
            d = y - m
            v = jnp.sum(jnp.sum(d * d, axis=1, keepdims=True), axis=0, keepdims=True)
            var = lane_group_mean(v)
            return d * jax.lax.rsqrt(var + _BN_EPS)

        def pw_conv(y, wmat):     # 1x1 conv == one dense MXU dot (block-diag weight)
            yf = y.reshape(H * W, NC)
            return jnp.dot(yf, wmat,
                           preferred_element_type=jnp.float32).reshape(H, W, NC)

        def dw_conv(wtaps, K, dil):   # depthwise KxK, stride 1, SAME, over the interior
            o = P - dil * (K - 1) // 2
            acc = pad_ref[o:o + H, o:o + W, :] * wtaps[0]
            for t in range(1, K * K):
                ky, kx = divmod(t, K)
                acc = acc + (pad_ref[o + ky * dil:o + ky * dil + H,
                                     o + kx * dil:o + kx * dil + W, :] * wtaps[t])
            return acc

        # --- pools: one shared interior write of x --------------------------
        write_interior(x)
        ring(_NEG)
        o1 = P - 1
        mp = pad_ref[o1:o1 + H, o1:o1 + W, :]            # (0,0) tap seeds the max
        for t in range(1, 9):
            ky, kx = divmod(t, 3)
            mp = jnp.maximum(mp, pad_ref[o1 + ky:o1 + ky + H, o1 + kx:o1 + kx + W, :])
        ring(0.0)                                         # restore zero halo
        ap = pad_ref[o1:o1 + H, o1:o1 + W, :]
        for t in range(1, 9):
            ky, kx = divmod(t, 3)
            ap = ap + pad_ref[o1 + ky:o1 + ky + H, o1 + kx:o1 + kx + W, :]
        # count_include_pad=False divisor, synthesized in-kernel.
        yi = jax.lax.broadcasted_iota(jnp.int32, (H, W, NC), 0)
        xi = jax.lax.broadcasted_iota(jnp.int32, (H, W, NC), 1)
        cy = 3.0 - jnp.where(yi == 0, 1.0, 0.0) - jnp.where(yi == H - 1, 1.0, 0.0)
        cx = 3.0 - jnp.where(xi == 0, 1.0, 0.0) - jnp.where(xi == W - 1, 1.0, 0.0)
        ap = ap / (cy * cx)

        acc = mix_w(0) * bn(mp)                           # max_pool_3x3 -> BN
        acc = acc + mix_w(1) * bn(ap)                     # avg_pool_3x3 -> BN
        acc = acc + mix_w(2) * x                          # skip_connect (identity)

        # --- one shared interior write of relu(x) ----------------------------
        write_interior(jnp.maximum(x, 0.0))
        acc = acc + mix_w(5) * bn(pw_conv(dw_conv(dw3[2], 3, 2), pw[4]))   # dil_conv_3x3
        acc = acc + mix_w(6) * bn(pw_conv(dw_conv(dw5[2], 5, 2), pw[5]))   # dil_conv_5x5
        y1 = bn(pw_conv(dw_conv(dw3[0], 3, 1), pw[0]))                     # sep3 stage 1
        z1 = bn(pw_conv(dw_conv(dw5[0], 5, 1), pw[2]))                     # sep5 stage 1

        # --- sep conv second stages ------------------------------------------
        write_interior(jnp.maximum(y1, 0.0))
        acc = acc + mix_w(3) * bn(pw_conv(dw_conv(dw3[1], 3, 1), pw[1]))   # sep_conv_3x3
        write_interior(jnp.maximum(z1, 0.0))
        acc = acc + mix_w(4) * bn(pw_conv(dw_conv(dw5[1], 5, 1), pw[3]))   # sep_conv_5x5
        # primitive 7 ('none') contributes exactly zero -- dropped.

        @pl.when(e == 0)
        def _first():
            o_ref[...] = acc

        @pl.when(e > 0)
        def _rest():
            o_ref[...] += acc


def node_forward(states, node_packed, w_node, *, N, C):
    """One DAG node: sum_j MixedOp(states[j], w_node[j]).  states: list of (H,W,N*C)."""
    E = len(states)
    H, W, NC = states[0].shape
    EH = -(-E // _CORE_SPLIT)                              # edges per core (ceil)

    x_stack = jnp.stack(states, axis=0)                    # (E, H, W, NC)
    mixw = jnp.asarray(w_node, jnp.float32).reshape(E * _NUM_PRIMS)

    def edge_map(ci, ei):
        return (jnp.minimum(ci * EH + ei, E - 1), 0, 0, 0)  # clamp dummy trailing edge

    partials = pl.pallas_call(
        functools.partial(_node_edges_kernel, H=H, W=W, N=N, C=C, E=E, EH=EH),
        grid=(_CORE_SPLIT, EH),
        in_specs=[
            pl.BlockSpec(memory_space=pltpu.MemorySpace.SMEM),      # mix weights
            pl.BlockSpec((None, H, W, NC), edge_map),               # edge input state
            pl.BlockSpec((None, 6, NC, NC), edge_map),              # block-diag 1x1 weights
            pl.BlockSpec((None, 3, 9, NC), edge_map),               # 3x3 depthwise taps
            pl.BlockSpec((None, 3, 25, NC), edge_map),              # 5x5 depthwise taps
        ],
        out_specs=pl.BlockSpec((None, H, W, NC), lambda ci, ei: (ci, 0, 0, 0)),
        out_shape=jax.ShapeDtypeStruct((_CORE_SPLIT, H, W, NC), jnp.float32),
        scratch_shapes=[pltpu.VMEM((H + 2 * _PMAX, W + 2 * _PMAX, NC), jnp.float32)],
        compiler_params=pltpu.CompilerParams(
            dimension_semantics=("parallel", "arbitrary")),
    )(mixw, x_stack, node_packed["pw"], node_packed["dw3"], node_packed["dw5"])
    return partials[0] + partials[1]


# ----------------------------------------------------------------------------
# SearchCell forward (NCHW in / NCHW out, matching the PyTorch module)
# ----------------------------------------------------------------------------

def search_cell_forward(s0_nchw, s1_nchw, w_dag, packed):
    N = s0_nchw.shape[0]
    C = packed["preproc0"].shape[1]
    s0 = jnp.transpose(s0_nchw, (0, 2, 3, 1)).astype(jnp.float32)   # NHWC
    s1 = jnp.transpose(s1_nchw, (0, 2, 3, 1)).astype(jnp.float32)
    s0 = std_conv(s0, packed["preproc0"])                           # (H, W, N*C)
    s1 = std_conv(s1, packed["preproc1"])
    H, W, _ = s0.shape
    states = [s0, s1]
    for node_packed, w_node in zip(packed["nodes"], w_dag):
        states.append(node_forward(states, node_packed, w_node, N=N, C=C))
    outs = [s.reshape(H, W, N, C) for s in states[2:]]
    s_out = jnp.stack(outs, axis=0)                                 # (nodes, H, W, N, C)
    s_out = jnp.transpose(s_out, (3, 0, 4, 1, 2))                   # (N, nodes, C, H, W)
    return s_out.reshape(N, len(outs) * C, H, W)                    # channel concat, node order


# ----------------------------------------------------------------------------
# Deterministic synthetic parameters + one-time lane-dense packing
# ----------------------------------------------------------------------------

def init_params(key, ppre_c, pre_c, C, num_nodes):
    keys = iter(jax.random.split(key, 4096))

    def nrm(shape, scale=0.2):
        return scale * jax.random.normal(next(keys), shape, jnp.float32)

    params = {"preproc0": nrm((ppre_c, C)),     # 1x1 conv weight as (Cin, Cout)
              "preproc1": nrm((pre_c, C)),
              "dag": []}
    for i in range(num_nodes):
        edges = []
        for _ in range(2 + i):
            edges.append({
                "sep3": {"dw1": nrm((3, 3, C)), "pw1": nrm((C, C)),
                         "dw2": nrm((3, 3, C)), "pw2": nrm((C, C))},
                "sep5": {"dw1": nrm((5, 5, C)), "pw1": nrm((C, C)),
                         "dw2": nrm((5, 5, C)), "pw2": nrm((C, C))},
                "dil3": {"dw": nrm((3, 3, C)), "pw": nrm((C, C))},
                "dil5": {"dw": nrm((5, 5, C)), "pw": nrm((C, C))},
            })
        params["dag"].append(edges)
    return params


def pack_cell_params(params, N):
    """One-time packing: block-diag 1x1 weights (N*C,N*C) and N-tiled depthwise taps."""
    C = params["preproc0"].shape[1]
    eye = jnp.eye(N, dtype=jnp.float32)

    def bd(w):                       # (Cin, Cout) -> block-diagonal (N*Cin, N*Cout)
        return jnp.kron(eye, w)

    def taps(w, K):                  # (K, K, C) -> (K*K, N*C), n-major lane packing
        return jnp.tile(w.reshape(K * K, C), (1, N))

    nodes = []
    for edges in params["dag"]:
        pw = jnp.stack([jnp.stack([bd(ep["sep3"]["pw1"]), bd(ep["sep3"]["pw2"]),
                                   bd(ep["sep5"]["pw1"]), bd(ep["sep5"]["pw2"]),
                                   bd(ep["dil3"]["pw"]), bd(ep["dil5"]["pw"])], 0)
                        for ep in edges], 0)                         # (E, 6, NC, NC)
        dw3 = jnp.stack([jnp.stack([taps(ep["sep3"]["dw1"], 3),
                                    taps(ep["sep3"]["dw2"], 3),
                                    taps(ep["dil3"]["dw"], 3)], 0)
                         for ep in edges], 0)                        # (E, 3, 9, NC)
        dw5 = jnp.stack([jnp.stack([taps(ep["sep5"]["dw1"], 5),
                                    taps(ep["sep5"]["dw2"], 5),
                                    taps(ep["dil5"]["dw"], 5)], 0)
                         for ep in edges], 0)                        # (E, 3, 25, NC)
        nodes.append({"pw": pw, "dw3": dw3, "dw5": dw5})
    return {"preproc0": params["preproc0"], "preproc1": params["preproc1"],
            "nodes": nodes}


# ----------------------------------------------------------------------------
# Demo
# ----------------------------------------------------------------------------

if __name__ == "__main__":
    key = jax.random.PRNGKey(0)
    N, Hs, Ws = 2, 8, 8
    ppre_c, pre_c, C = 6, 5, 8
    num_nodes = 3

    k_s0, k_s1, k_w, k_p = jax.random.split(key, 4)
    s0 = jax.random.normal(k_s0, (N, ppre_c, Hs, Ws), jnp.float32)   # NCHW like PyTorch
    s1 = jax.random.normal(k_s1, (N, pre_c, Hs, Ws), jnp.float32)

    wkeys = jax.random.split(k_w, num_nodes)
    # w_dag: per node, softmaxed architecture weights of shape (num_in_edges, 8)
    w_dag = [jax.nn.softmax(jax.random.normal(wkeys[i], (2 + i, _NUM_PRIMS), jnp.float32),
                            axis=-1)
             for i in range(num_nodes)]

    params = init_params(k_p, ppre_c, pre_c, C, num_nodes)
    packed = pack_cell_params(params, N)       # one-time weight packing (not per forward)

    out = search_cell_forward(s0, s1, w_dag, packed)
    out = jax.block_until_ready(out)
    assert out.shape == (N, num_nodes * C, Hs, Ws), out.shape
    assert bool(jnp.all(jnp.isfinite(out)))
    print("KERNEL_OK")
</pallas_src>

<mosaic_0001>
module attributes {stable_mosaic.version = 11 : i64} {
  func.func @_stdconv_kernel(%arg0: i32, %arg1: memref<128x6xf32, #tpu.memory_space<vmem>>, %arg2: memref<6x8xf32, #tpu.memory_space<vmem>>, %arg3: memref<128x8xf32, #tpu.memory_space<vmem>>) attributes {dimension_semantics = [#tpu.dimension_semantics<arbitrary>], iteration_bounds = array<i64: 1>, scalar_prefetch = 0 : i64, scratch_operands = 0 : i64, tpu.core_type = #tpu.core_type<tc>, window_params = [{pipeline_mode = #tpu.pipeline_mode<synchronous>, transform_indices = @transform_0, window_bounds = array<i64: 128, 6>}, {pipeline_mode = #tpu.pipeline_mode<synchronous>, transform_indices = @transform_1, window_bounds = array<i64: 6, 8>}, {pipeline_mode = #tpu.pipeline_mode<synchronous>, transform_indices = @transform_2, window_bounds = array<i64: 128, 8>}]} {
    %c0 = arith.constant 0 : index
    %c0_0 = arith.constant 0 : index
    %0 = vector.load %arg1[%c0, %c0_0] : memref<128x6xf32, #tpu.memory_space<vmem>>, vector<128x6xf32>
    %cst = arith.constant 0.000000e+00 : f32
    %1 = vector.broadcast %cst : f32 to vector<128x6xf32>
    %2 = arith.maximumf %0, %1 : vector<128x6xf32>
    %c0_1 = arith.constant 0 : index
    %c0_2 = arith.constant 0 : index
    %3 = vector.load %arg2[%c0_1, %c0_2] : memref<6x8xf32, #tpu.memory_space<vmem>>, vector<6x8xf32>
    %cst_3 = arith.constant dense<0.000000e+00> : vector<128x8xf32>
    %4 = tpu.matmul %2, %3, %cst_3 {dimension_numbers = #tpu.dot_dimension_numbers<[1], [0], [0], [1], [0, 0, 1, 1], [], []>} : vector<128x6xf32>, vector<6x8xf32>, vector<128x8xf32> -> vector<128x8xf32>
    %cst_4 = arith.constant dense<0.000000e+00> : vector<8xf32>
    %5 = vector.multi_reduction <add>, %4, %cst_4 [0] : vector<128x8xf32> to vector<8xf32>
    %6 = vector.shape_cast %5 : vector<8xf32> to vector<1x8xf32>
    %cst_5 = arith.constant 1.280000e+02 : f32
    %7 = vector.broadcast %cst_5 : f32 to vector<1x8xf32>
    %8 = arith.divf %6, %7 : vector<1x8xf32>
    %9 = vector.broadcast %8 : vector<1x8xf32> to vector<128x8xf32>
    %10 = arith.subf %4, %9 : vector<128x8xf32>
    %11 = arith.mulf %10, %10 : vector<128x8xf32>
    %cst_6 = arith.constant dense<0.000000e+00> : vector<8xf32>
    %12 = vector.multi_reduction <add>, %11, %cst_6 [0] : vector<128x8xf32> to vector<8xf32>
    %13 = vector.shape_cast %12 : vector<8xf32> to vector<1x8xf32>
    %cst_7 = arith.constant 1.280000e+02 : f32
    %14 = vector.broadcast %cst_7 : f32 to vector<1x8xf32>
    %15 = arith.divf %13, %14 : vector<1x8xf32>
    %cst_8 = arith.constant 9.99999974E-6 : f32
    %16 = vector.broadcast %cst_8 : f32 to vector<1x8xf32>
    %17 = arith.addf %15, %16 : vector<1x8xf32>
    %18 = math.rsqrt %17 : vector<1x8xf32>
    %19 = vector.broadcast %18 : vector<1x8xf32> to vector<128x8xf32>
    %20 = arith.mulf %10, %19 : vector<128x8xf32>
    %c0_9 = arith.constant 0 : index
    %c0_10 = arith.constant 0 : index
    %21 = vector.load %arg3[%c0_9, %c0_10] : memref<128x8xf32, #tpu.memory_space<vmem>>, vector<128x8xf32>
    tpu.vector_store %arg3[%c0_9, %c0_10], %20 {strides = array<i32>} : memref<128x8xf32, #tpu.memory_space<vmem>>, vector<128x8xf32>,
    return
  }
  func.func @transform_0(%arg0: i32) -> (i32, i32) {
    %c0_i32 = arith.constant 0 : i32
    %c0_i32_0 = arith.constant 0 : i32
    %c0_i32_1 = arith.constant 0 : i32
    return %c0_i32, %c0_i32_0 : i32, i32
  }
  func.func @transform_1(%arg0: i32) -> (i32, i32) {
    %c0_i32 = arith.constant 0 : i32
    %c0_i32_0 = arith.constant 0 : i32
    %c0_i32_1 = arith.constant 0 : i32
    return %c0_i32, %c0_i32_0 : i32, i32
  }
  func.func @transform_2(%arg0: i32) -> (i32, i32) {
    %c0_i32 = arith.constant 0 : i32
    %c0_i32_0 = arith.constant 0 : i32
    %c0_i32_1 = arith.constant 0 : i32
    return %c0_i32, %c0_i32_0 : i32, i32
  }
}

</mosaic_0001>

<llo_original>
// kernel: tpu_custom_call.1
$region0: #{tpu_custom_call.1}
  #allocation0 [shape = 'u32[]', space=smem, size = 0x4, offset = 0x4, fixed_abs, tag = 'smem constant byte address 0x4 - core index']
  #allocation1 [shape = 'u32[144,128]{1,0:T(1,128)}', space=vmem, size = 0x12000, scoped, tag = 'internal scratch']
  %s0 = inlined_call_operand.vmem [shape: f32[128,6], index: 0, kind: input, shape index: {}]
  %s1 = inlined_call_operand.vmem [shape: f32[6,8], index: 1, kind: input, shape index: {}]
  %s2 = inlined_call_operand.vmem [shape: f32[128,8], index: 2, kind: output, shape index: {}]
  %s3 = sld [smem:[#allocation0]]
  $region18: #{tpu_custom_call.1} parent=0
    _
  %s5 = ssub.s32 1, %s3
  %s6 = scalar_select 0, %s5, %s3
  // Predicated region
  $region2: #{tpu_custom_call.1} parent=0 // pred_check
    _
  $region3: #{tpu_custom_call.1} parent=0 // pred_check_branch
    %8 = sbr.rel (0) target = $region5
  $region4: #{tpu_custom_call.1} parent=0 // pred_region
    _
  $region5: #{tpu_custom_call.1} parent=0 // pred_fallthru
    _
  // Predicated region
  $region6: #{tpu_custom_call.1} parent=0 // pred_check
    _
  $region7: #{tpu_custom_call.1} parent=0 // pred_check_branch
    %10 = sbr.rel (0) target = $region9
  $region8: #{tpu_custom_call.1} parent=0 // pred_region
    _
  $region9: #{tpu_custom_call.1} parent=0 // pred_fallthru
    _
  %v11 = vld [vmem:[%s0] sm:$0xff]
  %v12 = vld [vmem:[%s0 + $0x8] sm:$0xff]
  %v13 = vld [vmem:[%s0 + $0x10] sm:$0xff]
  %v14 = vld [vmem:[%s0 + $0x18] sm:$0xff]
  %v15 = vld [vmem:[%s0 + $0x20] sm:$0xff]
  %v16 = vld [vmem:[%s0 + $0x28] sm:$0xff]
  %v17 = vld [vmem:[%s0 + $0x30] sm:$0xff]
  %v18 = vld [vmem:[%s0 + $0x38] sm:$0xff]
  %v19 = vld [vmem:[%s0 + $0x40] sm:$0xff]
  %v20 = vld [vmem:[%s0 + $0x48] sm:$0xff]
  %v21 = vld [vmem:[%s0 + $0x50] sm:$0xff]
  %v22 = vld [vmem:[%s0 + $0x58] sm:$0xff]
  %v23 = vld [vmem:[%s0 + $0x60] sm:$0xff]
  %v24 = vld [vmem:[%s0 + $0x68] sm:$0xff]
  %v25 = vld [vmem:[%s0 + $0x70] sm:$0xff]
  %v26 = vld [vmem:[%s0 + $0x78] sm:$0xff]
  %v27 = vmax.f32 %v11, 0.0
  %v28 = vmax.f32 %v12, 0.0
  %v29 = vmax.f32 %v13, 0.0
  %v30 = vmax.f32 %v14, 0.0
  %v31 = vmax.f32 %v15, 0.0
  %v32 = vmax.f32 %v16, 0.0
  %v33 = vmax.f32 %v17, 0.0
  %v34 = vmax.f32 %v18, 0.0
  %v35 = vmax.f32 %v19, 0.0
  %v36 = vmax.f32 %v20, 0.0
  %v37 = vmax.f32 %v21, 0.0
  %v38 = vmax.f32 %v22, 0.0
  %v39 = vmax.f32 %v23, 0.0
  %v40 = vmax.f32 %v24, 0.0
  %v41 = vmax.f32 %v25, 0.0
  %v42 = vmax.f32 %v26, 0.0
  %v43 = vld [vmem:[%s1] sm:$0x3f]
  %vm44 = vcmask 48128
  %v46 = vsel %vm44, %v27, 0
  %v49 = vsel %vm44, %v28, 0
  %v52 = vsel %vm44, %v29, 0
  %v55 = vsel %vm44, %v30, 0
  %v58 = vsel %vm44, %v31, 0
  %v61 = vsel %vm44, %v32, 0
  %v64 = vsel %vm44, %v33, 0
  %v67 = vsel %vm44, %v34, 0
  %v70 = vsel %vm44, %v35, 0
  %v73 = vsel %vm44, %v36, 0
  %v76 = vsel %vm44, %v37, 0
  %v79 = vsel %vm44, %v38, 0
  %v82 = vsel %vm44, %v39, 0
  %v85 = vsel %vm44, %v40, 0
  %v88 = vsel %vm44, %v41, 0
  %v91 = vsel %vm44, %v42, 0
  %vm93 = vcmask 1045504
  %v95 = vsel %vm93, %v43, 0
  %97 = vmatprep.subr.mxu0 0.0
  %98 = vmatpush1.msra.mxu0 0.0
  %99 = vmatprep.subr.mxu0 0.0
  %100 = vmatpush1.msra.mxu0 0.0
  %101 = vmatprep.subr.mxu0 0.0
  %102 = vmatpush1.msra.mxu0 0.0
  %103 = vmatprep.subr.mxu0 0.0
  %104 = vmatpush1.msra.mxu0 0.0
  %105 = vmatprep.subr.mxu0 0.0
  %106 = vmatpush1.msra.mxu0 0.0
  %107 = vmatprep.subr.mxu0 0.0
  %108 = vmatpush1.msra.mxu0 0.0
  %109 = vmatprep.subr.mxu0 0.0
  %110 = vmatpush1.msra.mxu0 0.0
  %111 = vmatprep.subr.mxu0 0.0
  %112 = vmatpush1.msra.mxu0 0.0
  %113 = vmatprep.subr.mxu0 0.0
  %114 = vmatpush1.msra.mxu0 0.0
  %115 = vmatprep.subr.mxu0 0.0
  %116 = vmatpush1.msra.mxu0 0.0
  %117 = vmatprep.subr.mxu0 0.0
  %118 = vmatpush1.msra.mxu0 0.0
  %119 = vmatprep.subr.mxu0 0.0
  %120 = vmatpush1.msra.mxu0 0.0
  %121 = vmatprep.subr.mxu0 0.0
  %122 = vmatpush1.msra.mxu0 0.0
  %123 = vmatprep.subr.mxu0 0.0
  %124 = vmatpush1.msra.mxu0 0.0
  %125 = vmatprep.subr.mxu0 0.0
  %126 = vmatpush1.msra.mxu0 0.0
  %127 = vmatprep.subr.mxu0 0.0
  %128 = vmatpush1.msra.mxu0 %v95
  %129 = vmatprep.subr.mxu0 0.0
  %130 = vmatpush2.msra.mxu0 0.0
  %131 = vmatprep.subr.mxu0 0.0
  %132 = vmatpush2.msra.mxu0 0.0
  %133 = vmatprep.subr.mxu0 0.0
  %134 = vmatpush2.msra.mxu0 0.0
  %135 = vmatprep.subr.mxu0 0.0
  %136 = vmatpush2.msra.mxu0 0.0
  %137 = vmatprep.subr.mxu0 0.0
  %138 = vmatpush2.msra.mxu0 0.0
  %139 = vmatprep.subr.mxu0 0.0
  %140 = vmatpush2.msra.mxu0 0.0
  %141 = vmatprep.subr.mxu0 0.0
  %142 = vmatpush2.msra.mxu0 0.0
  %143 = vmatprep.subr.mxu0 0.0
  %144 = vmatpush2.msra.mxu0 0.0
  %145 = vmatprep.subr.mxu0 0.0
  %146 = vmatpush2.msra.mxu0 0.0
  %147 = vmatprep.subr.mxu0 0.0
  %148 = vmatpush2.msra.mxu0 0.0
  %149 = vmatprep.subr.mxu0 0.0
  %150 = vmatpush2.msra.mxu0 0.0
  %151 = vmatprep.subr.mxu0 0.0
  %152 = vmatpush2.msra.mxu0 0.0
  %153 = vmatprep.subr.mxu0 0.0
  %154 = vmatpush2.msra.mxu0 0.0
  %155 = vmatprep.subr.mxu0 0.0
  %156 = vmatpush2.msra.mxu0 0.0
  %157 = vmatprep.subr.mxu0 0.0
  %158 = vmatpush2.msra.mxu0 0.0
  %159 = vmatprep.subr.mxu0 0.0
  %160 = vmatpush2.msra.mxu0 0.0
  %161 = vmatprep.mubr.f32.mxu0 0.0
  %162 = vmatmul.mubr.f32.gmra.mxu0 %v46
  %v163 = vpop.f32.mrf.mxu0
  %v164 = vadd.f32 0.0, %v163
  %v165 = vpop.f32.mrf.mxu0
  %166 = vmatprep.mubr.f32.mxu0 0.0
  %167 = vmatmul.mubr.f32.gmra.mxu0 %v49
  %v168 = vpop.f32.mrf.mxu0
  %v169 = vadd.f32 0.0, %v168
  %v170 = vpop.f32.mrf.mxu0
  %171 = vmatprep.mubr.f32.mxu0 0.0
  %172 = vmatmul.mubr.f32.gmra.mxu0 %v52
  %v173 = vpop.f32.mrf.mxu0
  %v174 = vadd.f32 0.0, %v173
  %v175 = vpop.f32.mrf.mxu0
  %176 = vmatprep.mubr.f32.mxu0 0.0
  %177 = vmatmul.mubr.f32.gmra.mxu0 %v55
  %v178 = vpop.f32.mrf.mxu0
  %v179 = vadd.f32 0.0, %v178
  %v180 = vpop.f32.mrf.mxu0
  %181 = vmatprep.mubr.f32.mxu0 0.0
  %182 = vmatmul.mubr.f32.gmra.mxu0 %v58
  %v183 = vpop.f32.mrf.mxu0
  %v184 = vadd.f32 0.0, %v183
  %v185 = vpop.f32.mrf.mxu0
  %186 = vmatprep.mubr.f32.mxu0 0.0
  %187 = vmatmul.mubr.f32.gmra.mxu0 %v61
  %v188 = vpop.f32.mrf.mxu0
  %v189 = vadd.f32 0.0, %v188
  %v190 = vpop.f32.mrf.mxu0
  %191 = vmatprep.mubr.f32.mxu0 0.0
  %192 = vmatmul.mubr.f32.gmra.mxu0 %v64
  %v193 = vpop.f32.mrf.mxu0
  %v194 = vadd.f32 0.0, %v193
  %v195 = vpop.f32.mrf.mxu0
  %196 = vmatprep.mubr.f32.mxu0 0.0
  %197 = vmatmul.mubr.f32.gmra.mxu0 %v67
  %v198 = vpop.f32.mrf.mxu0
  %v199 = vadd.f32 0.0, %v198
  %v200 = vpop.f32.mrf.mxu0
  %201 = vmatprep.mubr.f32.mxu0 0.0
  %202 = vmatmul.mubr.f32.gmra.mxu0 %v70
  %v203 = vpop.f32.mrf.mxu0
  %v204 = vadd.f32 0.0, %v203
  %v205 = vpop.f32.mrf.mxu0
  %206 = vmatprep.mubr.f32.mxu0 0.0
  %207 = vmatmul.mubr.f32.gmra.mxu0 %v73
  %v208 = vpop.f32.mrf.mxu0
  %v209 = vadd.f32 0.0, %v208
  %v210 = vpop.f32.mrf.mxu0
  %211 = vmatprep.mubr.f32.mxu0 0.0
  %212 = vmatmul.mubr.f32.gmra.mxu0 %v76
  %v213 = vpop.f32.mrf.mxu0
  %v214 = vadd.f32 0.0, %v213
  %v215 = vpop.f32.mrf.mxu0
  %216 = vmatprep.mubr.f32.mxu0 0.0
  %217 = vmatmul.mubr.f32.gmra.mxu0 %v79
  %v218 = vpop.f32.mrf.mxu0
  %v219 = vadd.f32 0.0, %v218
  %v220 = vpop.f32.mrf.mxu0
  %221 = vmatprep.mubr.f32.mxu0 0.0
  %222 = vmatmul.mubr.f32.gmra.mxu0 %v82
  %v223 = vpop.f32.mrf.mxu0
  %v224 = vadd.f32 0.0, %v223
  %v225 = vpop.f32.mrf.mxu0
  %226 = vmatprep.mubr.f32.mxu0 0.0
  %227 = vmatmul.mubr.f32.gmra.mxu0 %v85
  %v228 = vpop.f32.mrf.mxu0
  %v229 = vadd.f32 0.0, %v228
  %v230 = vpop.f32.mrf.mxu0
  %231 = vmatprep.mubr.f32.mxu0 0.0
  %232 = vmatmul.mubr.f32.gmra.mxu0 %v88
  %v233 = vpop.f32.mrf.mxu0
  %v234 = vadd.f32 0.0, %v233
  %v235 = vpop.f32.mrf.mxu0
  %236 = vmatprep.mubr.f32.mxu0 0.0
  %237 = vmatmul.mubr.f32.gmra.mxu0 %v91
  %v238 = vpop.f32.mrf.mxu0
  %v239 = vadd.f32 0.0, %v238
  %v240 = vpop.f32.mrf.mxu0
  %241 = vdwg.mxu0
  %vm242 = vcmask 64512
  %v243 = vsel %vm242, %v164, 0.0
  %v244 = vsel %vm242, %v169, 0.0
  %v245 = vadd.f32 %v243, %v244
  %v246 = vsel %vm242, %v174, 0.0
  %v247 = vadd.f32 %v245, %v246
  %v248 = vsel %vm242, %v179, 0.0
  %v249 = vadd.f32 %v247, %v248
  %v250 = vsel %vm242, %v184, 0.0
  %v251 = vadd.f32 %v249, %v250
  %v252 = vsel %vm242, %v189, 0.0
  %v253 = vadd.f32 %v251, %v252
  %v254 = vsel %vm242, %v194, 0.0
  %v255 = vadd.f32 %v253, %v254
  %v256 = vsel %vm242, %v199, 0.0
  %v257 = vadd.f32 %v255, %v256
  %v258 = vsel %vm242, %v204, 0.0
  %v259 = vadd.f32 %v257, %v258
  %v260 = vsel %vm242, %v209, 0.0
  %v261 = vadd.f32 %v259, %v260
  %v262 = vsel %vm242, %v214, 0.0
  %v263 = vadd.f32 %v261, %v262
  %v264 = vsel %vm242, %v219, 0.0
  %v265 = vadd.f32 %v263, %v264
  %v266 = vsel %vm242, %v224, 0.0
  %v267 = vadd.f32 %v265, %v266
  %v268 = vsel %vm242, %v229, 0.0
  %v269 = vadd.f32 %v267, %v268
  %v270 = vsel %vm242, %v234, 0.0
  %v271 = vadd.f32 %v269, %v270
  %v272 = vsel %vm242, %v239, 0.0
  %v273 = vadd.f32 %v271, %v272
  %v274 = vrot.slane %v273, 4
  %v275 = vadd.f32 %v273, %v274
  %v276 = vrot.slane %v275, 2
  %v277 = vadd.f32 %v275, %v276
  %v278 = vrot.slane %v277, 1
  %v279 = vadd.f32 %v277, %v278
  %v280 = vrcp.pop 128.0
  %v281 = vmul.f32 %v279, %v280
  %v282 = vsub.f32 %v164, %v281
  %v283 = vsub.f32 %v169, %v281
  %v284 = vsub.f32 %v174, %v281
  %v285 = vsub.f32 %v179, %v281
  %v286 = vsub.f32 %v184, %v281
  %v287 = vsub.f32 %v189, %v281
  %v288 = vsub.f32 %v194, %v281
  %v289 = vsub.f32 %v199, %v281
  %v290 = vsub.f32 %v204, %v281
  %v291 = vsub.f32 %v209, %v281
  %v292 = vsub.f32 %v214, %v281
  %v293 = vsub.f32 %v219, %v281
  %v294 = vsub.f32 %v224, %v281
  %v295 = vsub.f32 %v229, %v281
  %v296 = vsub.f32 %v234, %v281
  %v297 = vsub.f32 %v239, %v281
  %v298 = vmul.f32 %v282, %v282
  %v299 = vmul.f32 %v283, %v283
  %v300 = vmul.f32 %v284, %v284
  %v301 = vmul.f32 %v285, %v285
  %v302 = vmul.f32 %v286, %v286
  %v303 = vmul.f32 %v287, %v287
  %v304 = vmul.f32 %v288, %v288
  %v305 = vmul.f32 %v289, %v289
  %v306 = vmul.f32 %v290, %v290
  %v307 = vmul.f32 %v291, %v291
  %v308 = vmul.f32 %v292, %v292
  %v309 = vmul.f32 %v293, %v293
  %v310 = vmul.f32 %v294, %v294
  %v311 = vmul.f32 %v295, %v295
  %v312 = vmul.f32 %v296, %v296
  %v313 = vmul.f32 %v297, %v297
  %v314 = vsel %vm242, %v298, 0.0
  %v315 = vsel %vm242, %v299, 0.0
  %v316 = vadd.f32 %v314, %v315
  %v317 = vsel %vm242, %v300, 0.0
  %v318 = vadd.f32 %v316, %v317
  %v319 = vsel %vm242, %v301, 0.0
  %v320 = vadd.f32 %v318, %v319
  %v321 = vsel %vm242, %v302, 0.0
  %v322 = vadd.f32 %v320, %v321
  %v323 = vsel %vm242, %v303, 0.0
  %v324 = vadd.f32 %v322, %v323
  %v325 = vsel %vm242, %v304, 0.0
  %v326 = vadd.f32 %v324, %v325
  %v327 = vsel %vm242, %v305, 0.0
  %v328 = vadd.f32 %v326, %v327
  %v329 = vsel %vm242, %v306, 0.0
  %v330 = vadd.f32 %v328, %v329
  %v331 = vsel %vm242, %v307, 0.0
  %v332 = vadd.f32 %v330, %v331
  %v333 = vsel %vm242, %v308, 0.0
  %v334 = vadd.f32 %v332, %v333
  %v335 = vsel %vm242, %v309, 0.0
  %v336 = vadd.f32 %v334, %v335
  %v337 = vsel %vm242, %v310, 0.0
  %v338 = vadd.f32 %v336, %v337
  %v339 = vsel %vm242, %v311, 0.0
  %v340 = vadd.f32 %v338, %v339
  %v341 = vsel %vm242, %v312, 0.0
  %v342 = vadd.f32 %v340, %v341
  %v343 = vsel %vm242, %v313, 0.0
  %v344 = vadd.f32 %v342, %v343
  %v345 = vrot.slane %v344, 4
  %v346 = vadd.f32 %v344, %v345
  %v347 = vrot.slane %v346, 2
  %v348 = vadd.f32 %v346, %v347
  %v349 = vrot.slane %v348, 1
  %v350 = vadd.f32 %v348, %v349
  %v351 = vmul.f32 %v350, %v280
  %v352 = vadd.f32 %v351, 1e-05
  %v353 = vrsqrt.pop %v352
  %v354 = vmul.f32 %v282, %v353
  %v355 = vmul.f32 %v283, %v353
  %v356 = vmul.f32 %v284, %v353
  %v357 = vmul.f32 %v285, %v353
  %v358 = vmul.f32 %v286, %v353
  %v359 = vmul.f32 %v287, %v353
  %v360 = vmul.f32 %v288, %v353
  %v361 = vmul.f32 %v289, %v353
  %v362 = vmul.f32 %v290, %v353
  %v363 = vmul.f32 %v291, %v353
  %v364 = vmul.f32 %v292, %v353
  %v365 = vmul.f32 %v293, %v353
  %v366 = vmul.f32 %v294, %v353
  %v367 = vmul.f32 %v295, %v353
  %v368 = vmul.f32 %v296, %v353
  %v369 = vmul.f32 %v297, %v353
  %370 = vst.msk [vmem:[%s2] sm:$0xff] %vm242, %v354
  %371 = vst.msk [vmem:[%s2 + $0x8] sm:$0xff] %vm242, %v355
  %372 = vst.msk [vmem:[%s2 + $0x10] sm:$0xff] %vm242, %v356
  %373 = vst.msk [vmem:[%s2 + $0x18] sm:$0xff] %vm242, %v357
  %374 = vst.msk [vmem:[%s2 + $0x20] sm:$0xff] %vm242, %v358
  %375 = vst.msk [vmem:[%s2 + $0x28] sm:$0xff] %vm242, %v359
  %376 = vst.msk [vmem:[%s2 + $0x30] sm:$0xff] %vm242, %v360
  %377 = vst.msk [vmem:[%s2 + $0x38] sm:$0xff] %vm242, %v361
  %378 = vst.msk [vmem:[%s2 + $0x40] sm:$0xff] %vm242, %v362
  %379 = vst.msk [vmem:[%s2 + $0x48] sm:$0xff] %vm242, %v363
  %380 = vst.msk [vmem:[%s2 + $0x50] sm:$0xff] %vm242, %v364
  %381 = vst.msk [vmem:[%s2 + $0x58] sm:$0xff] %vm242, %v365
  %382 = vst.msk [vmem:[%s2 + $0x60] sm:$0xff] %vm242, %v366
  %383 = vst.msk [vmem:[%s2 + $0x68] sm:$0xff] %vm242, %v367
  %384 = vst.msk [vmem:[%s2 + $0x70] sm:$0xff] %vm242, %v368
  %385 = vst.msk [vmem:[%s2 + $0x78] sm:$0xff] %vm242, %v369
  // Predicated region
  $region10: #{tpu_custom_call.1} parent=0 // pred_check
    _
  $region11: #{tpu_custom_call.1} parent=0 // pred_check_branch
    %387 = sbr.rel (0) target = $region13
  $region12: #{tpu_custom_call.1} parent=0 // pred_region
    _
  $region13: #{tpu_custom_call.1} parent=0 // pred_fallthru
    _
  // Predicated region
  $region14: #{tpu_custom_call.1} parent=0 // pred_check
    _
  $region15: #{tpu_custom_call.1} parent=0 // pred_check_branch
    %389 = sbr.rel (0) target = $region17
  $region16: #{tpu_custom_call.1} parent=0 // pred_region
    _
  $region17: #{tpu_custom_call.1} parent=0 // pred_fallthru
    _

</llo_original>
